<compile_context>
chip_gen: v6e
topology: v6e:2x2x1
jax: 0.10.0
libtpu: 0.0.40
codegen_flags: <defaults>
</compile_context>

<pallas_src>
import math

import jax
import jax.numpy as jnp
from jax import lax
from jax.experimental import pallas as pl
from jax.experimental.pallas import tpu as pltpu


# Large finite negative instead of -inf: identical softmax result for any row
# with at least one valid key, and no NaN for fully-padded rows.
_MASK_VALUE = -1e30


def _mha_head_kernel(x_ref, mkey_ref, mqry_ref, wqkv_ref, wo_ref, bqkv_ref,
                     bo_ref, out_ref):
    h = pl.program_id(1)
    num_heads = pl.num_programs(1)
    d = wo_ref.shape[1]

    x = x_ref[0]                                       # (S, H) f32

    # Fused per-head QKV projection: one (S,H)@(H,3d) MXU pass.
    # (1/sqrt(d) is already folded into the q columns/bias by the wrapper.)
    qkv = jnp.dot(x, wqkv_ref[0],
                  preferred_element_type=jnp.float32) + bqkv_ref[0]   # (S, 3d)
    q = qkv[:, :d].astype(jnp.bfloat16)
    k = qkv[:, d:2 * d].astype(jnp.bfloat16)
    v = qkv[:, 2 * d:].astype(jnp.bfloat16)

    # Scores: q @ k^T as an NT dot_general (bf16 inputs, f32 accumulation).
    s = lax.dot_general(q, k, (((1,), (1,)), ((), ())),
                        preferred_element_type=jnp.float32)           # (S, S)

    key_valid = mkey_ref[0] > 0.0                      # (1, S) lane-major keys
    s = jnp.where(key_valid, s, _MASK_VALUE)

    # Softmax, normalized AFTER P@V (S*d divides instead of S*S).
    m = jnp.max(s, axis=-1, keepdims=True)             # (S, 1)
    p = jnp.exp(s - m)                                 # (S, S), unnormalized
    l = jnp.sum(p, axis=-1, keepdims=True)             # (S, 1)
    ctx = jnp.dot(p.astype(jnp.bfloat16), v,
                  preferred_element_type=jnp.float32)                 # (S, d)
    ctx = ctx * pl.reciprocal(l, approx=True)

    # Per-head slice of the out-projection, accumulated into the revisited
    # full-width output block (lane-dense stores, no scratch).
    contrib = jnp.dot(ctx, wo_ref[0],
                      preferred_element_type=jnp.float32)             # (S, H)

    @pl.when(h == 0)
    def _():
        out_ref[0] = jnp.broadcast_to(bo_ref[...], contrib.shape)     # init bias

    out_ref[0] = out_ref[0] + contrib

    @pl.when(h == num_heads - 1)
    def _():
        out_ref[0] = out_ref[0] * mqry_ref[0]          # zero padded query rows


def multi_head_atten_pallas(x, mask_bool, params, num_heads):
    B, S, H = x.shape
    assert H % num_heads == 0
    d = H // num_heads
    scale = 1.0 / math.sqrt(d)

    mask_f = mask_bool.astype(jnp.float32)             # (B, S, 1)
    mask_qry = mask_f                                  # (B, S, 1)
    mask_key = jnp.transpose(mask_f, (0, 2, 1))        # (B, 1, S) keys on lanes

    # Fold the 1/sqrt(d) scale into the Q projection (one-time preprocessing).
    wq = params["wq"] * scale
    bq = params["bq"] * scale

    def split_heads_w(w):   # (H, H) -> (nh, H, d); head h = cols h*d:(h+1)*d
        return jnp.transpose(w.reshape(H, num_heads, d), (1, 0, 2))

    def split_heads_b(b):   # (1, H) -> (nh, 1, d)
        return jnp.transpose(b.reshape(1, num_heads, d), (1, 0, 2))

    # Fused per-head [Q | K | V] weight/bias blocks.
    w_qkv = jnp.concatenate(
        [split_heads_w(wq), split_heads_w(params["wk"]),
         split_heads_w(params["wv"])], axis=-1)        # (nh, H, 3d)
    b_qkv = jnp.concatenate(
        [split_heads_b(bq), split_heads_b(params["bk"]),
         split_heads_b(params["bv"])], axis=-1)        # (nh, 1, 3d)

    wo_heads = params["wo"].reshape(num_heads, d, H)   # head h = rows h*d:(h+1)*d
    bo = params["bo"]                                  # (1, H)

    # TODO(synk): attention-weight dropout (drop_prob) skipped — eval semantics.
    # TODO(synk): for long sequences add a query-tile grid axis (flash-style
    # online softmax) so the (S, S) score tile also fits v7x's 64 MiB VMEM.
    return pl.pallas_call(
        _mha_head_kernel,
        out_shape=jax.ShapeDtypeStruct((B, S, H), jnp.float32),
        grid_spec=pltpu.PrefetchScalarGridSpec(
            num_scalar_prefetch=0,
            grid=(B, num_heads),                       # head = reduction, last
            in_specs=[
                pl.BlockSpec((1, S, H), lambda b, h: (b, 0, 0)),       # x
                pl.BlockSpec((1, 1, S), lambda b, h: (b, 0, 0)),       # key mask
                pl.BlockSpec((1, S, 1), lambda b, h: (b, 0, 0)),       # query mask
                pl.BlockSpec((1, H, 3 * d), lambda b, h: (h, 0, 0)),   # w_qkv[h]
                pl.BlockSpec((1, d, H), lambda b, h: (h, 0, 0)),       # wo[h]
                pl.BlockSpec((1, 1, 3 * d), lambda b, h: (h, 0, 0)),   # b_qkv[h]
                pl.BlockSpec((1, H), lambda b, h: (0, 0)),             # bo
            ],
            out_specs=pl.BlockSpec((1, S, H), lambda b, h: (b, 0, 0)),
        ),
        compiler_params=pltpu.CompilerParams(
            dimension_semantics=("parallel", "arbitrary")),
    )(x, mask_key, mask_qry, w_qkv, wo_heads, b_qkv, bo)


def multi_head_atten_reference(x, mask_bool, params, num_heads):
    """Pure-JAX reference reproducing torch.nn.MultiheadAttention semantics."""
    B, S, H = x.shape
    d = H // num_heads
    mask_f = mask_bool.astype(jnp.float32)
    q = x @ params["wq"] + params["bq"]
    k = x @ params["wk"] + params["bk"]
    v = x @ params["wv"] + params["bv"]
    qh = q.reshape(B, S, num_heads, d)
    kh = k.reshape(B, S, num_heads, d)
    vh = v.reshape(B, S, num_heads, d)
    s = jnp.einsum("bqhd,bkhd->bhqk", qh, kh) / math.sqrt(d)
    key_valid = mask_bool[:, :, 0]                     # (B, S)
    s = jnp.where(key_valid[:, None, None, :], s, -jnp.inf)
    p = jax.nn.softmax(s, axis=-1)
    o = jnp.einsum("bhqk,bkhd->bqhd", p, vh).reshape(B, S, H)
    o = o @ params["wo"] + params["bo"]
    return o * mask_f


if __name__ == "__main__":
    # Small shapes consistent with the module: hidden_size=32, num_heads=4.
    B, S, H, NUM_HEADS = 2, 8, 32, 4

    key = jax.random.PRNGKey(0)
    k_x, k_q, k_k, k_v, k_o, k_bq, k_bk, k_bv, k_bo = jax.random.split(key, 9)

    xavier = 1.0 / math.sqrt(H)
    params = {
        "wq": jax.random.uniform(k_q, (H, H), jnp.float32, -xavier, xavier),
        "wk": jax.random.uniform(k_k, (H, H), jnp.float32, -xavier, xavier),
        "wv": jax.random.uniform(k_v, (H, H), jnp.float32, -xavier, xavier),
        "wo": jax.random.uniform(k_o, (H, H), jnp.float32, -xavier, xavier),
        "bq": jax.random.uniform(k_bq, (1, H), jnp.float32, -0.1, 0.1),
        "bk": jax.random.uniform(k_bk, (1, H), jnp.float32, -0.1, 0.1),
        "bv": jax.random.uniform(k_bv, (1, H), jnp.float32, -0.1, 0.1),
        "bo": jax.random.uniform(k_bo, (1, H), jnp.float32, -0.1, 0.1),
    }

    x = jax.random.normal(k_x, (B, S, H), jnp.float32)
    # mask (bool, B x key_seq_len x 1): batch 0 fully valid, batch 1 has 3 pads.
    valid_lens = jnp.array([S, 5])
    mask_bool = (jnp.arange(S)[None, :] < valid_lens[:, None])[..., None]  # (B,S,1)

    out = multi_head_atten_pallas(x, mask_bool, params, NUM_HEADS)
    out = jax.block_until_ready(out)

    ref = multi_head_atten_reference(x, mask_bool, params, NUM_HEADS)
    assert out.shape == (B, S, H)
    # Tolerance accounts for bf16 MXU inputs + approximate EUP reciprocal.
    assert jnp.allclose(out, ref, rtol=1e-2, atol=1e-2), "mismatch vs reference"

    print("KERNEL_OK")
</pallas_src>

<mosaic_0001>
module attributes {stable_mosaic.version = 11 : i64} {
  func.func @_mha_head_kernel(%arg0: i32, %arg1: i32, %arg2: memref<1x8x32xf32, #tpu.memory_space<vmem>>, %arg3: memref<1x1x8xf32, #tpu.memory_space<vmem>>, %arg4: memref<1x8x1xf32, #tpu.memory_space<vmem>>, %arg5: memref<1x32x24xf32, #tpu.memory_space<vmem>>, %arg6: memref<1x8x32xf32, #tpu.memory_space<vmem>>, %arg7: memref<1x1x24xf32, #tpu.memory_space<vmem>>, %arg8: memref<1x32xf32, #tpu.memory_space<vmem>>, %arg9: memref<1x8x32xf32, #tpu.memory_space<vmem>>) attributes {dimension_semantics = [#tpu.dimension_semantics<parallel>, #tpu.dimension_semantics<arbitrary>], iteration_bounds = array<i64: 2, 4>, scalar_prefetch = 0 : i64, scratch_operands = 0 : i64, tpu.core_type = #tpu.core_type<tc>, window_params = [{transform_indices = @transform_0, window_bounds = array<i64: 1, 8, 32>}, {transform_indices = @transform_1, window_bounds = array<i64: 1, 1, 8>}, {transform_indices = @transform_2, window_bounds = array<i64: 1, 8, 1>}, {transform_indices = @transform_3, window_bounds = array<i64: 1, 32, 24>}, {transform_indices = @transform_4, window_bounds = array<i64: 1, 8, 32>}, {transform_indices = @transform_5, window_bounds = array<i64: 1, 1, 24>}, {pipeline_mode = #tpu.pipeline_mode<synchronous>, transform_indices = @transform_6, window_bounds = array<i64: 1, 32>}, {transform_indices = @transform_7, window_bounds = array<i64: 1, 8, 32>}]} {
    %c0 = arith.constant 0 : index
    %c0_0 = arith.constant 0 : index
    %c0_1 = arith.constant 0 : index
    %0 = vector.load %arg2[%c0, %c0_0, %c0_1] : memref<1x8x32xf32, #tpu.memory_space<vmem>>, vector<1x8x32xf32>
    %1 = vector.shape_cast %0 : vector<1x8x32xf32> to vector<8x32xf32>
    %c0_2 = arith.constant 0 : index
    %c0_3 = arith.constant 0 : index
    %c0_4 = arith.constant 0 : index
    %2 = vector.load %arg5[%c0_2, %c0_3, %c0_4] : memref<1x32x24xf32, #tpu.memory_space<vmem>>, vector<1x32x24xf32>
    %3 = vector.shape_cast %2 : vector<1x32x24xf32> to vector<32x24xf32>
    %cst = arith.constant dense<0.000000e+00> : vector<8x24xf32>
    %4 = tpu.matmul %1, %3, %cst {dimension_numbers = #tpu.dot_dimension_numbers<[1], [0], [0], [1], [0, 0, 1, 1], [], []>} : vector<8x32xf32>, vector<32x24xf32>, vector<8x24xf32> -> vector<8x24xf32>
    %c0_5 = arith.constant 0 : index
    %c0_6 = arith.constant 0 : index
    %c0_7 = arith.constant 0 : index
    %5 = vector.load %arg7[%c0_5, %c0_6, %c0_7] : memref<1x1x24xf32, #tpu.memory_space<vmem>>, vector<1x1x24xf32>
    %6 = vector.shape_cast %5 : vector<1x1x24xf32> to vector<1x24xf32>
    %7 = vector.broadcast %6 : vector<1x24xf32> to vector<8x24xf32>
    %8 = arith.addf %4, %7 : vector<8x24xf32>
    %9 = vector.extract_strided_slice %8 {offsets = [0, 0], sizes = [8, 8], strides = [1, 1]} : vector<8x24xf32> to vector<8x8xf32>
    %10 = arith.truncf %9 : vector<8x8xf32> to vector<8x8xbf16>
    %11 = vector.extract_strided_slice %8 {offsets = [0, 8], sizes = [8, 8], strides = [1, 1]} : vector<8x24xf32> to vector<8x8xf32>
    %12 = arith.truncf %11 : vector<8x8xf32> to vector<8x8xbf16>
    %13 = vector.extract_strided_slice %8 {offsets = [0, 16], sizes = [8, 8], strides = [1, 1]} : vector<8x24xf32> to vector<8x8xf32>
    %14 = arith.truncf %13 : vector<8x8xf32> to vector<8x8xbf16>
    %cst_8 = arith.constant dense<0.000000e+00> : vector<8x8xf32>
    %15 = tpu.matmul %10, %12, %cst_8 {dimension_numbers = #tpu.dot_dimension_numbers<[1], [1], [0], [0], [0, 0, 1, 0], [], []>} : vector<8x8xbf16>, vector<8x8xbf16>, vector<8x8xf32> -> vector<8x8xf32>
    %c0_9 = arith.constant 0 : index
    %c0_10 = arith.constant 0 : index
    %c0_11 = arith.constant 0 : index
    %16 = vector.load %arg3[%c0_9, %c0_10, %c0_11] : memref<1x1x8xf32, #tpu.memory_space<vmem>>, vector<1x1x8xf32>
    %17 = vector.shape_cast %16 : vector<1x1x8xf32> to vector<1x8xf32>
    %cst_12 = arith.constant 0.000000e+00 : f32
    %18 = vector.broadcast %cst_12 : f32 to vector<1x8xf32>
    %19 = arith.cmpf ogt, %17, %18 : vector<1x8xf32>
    %cst_13 = arith.constant -1.000000e+30 : f32
    %20 = vector.shape_cast %19 : vector<1x8xi1> to vector<1x8xi1>
    %21 = vector.broadcast %20 : vector<1x8xi1> to vector<8x8xi1>
    %22 = vector.broadcast %cst_13 : f32 to vector<8x8xf32>
    %23 = arith.select %21, %15, %22 : vector<8x8xi1>, vector<8x8xf32>
    %cst_14 = arith.constant dense<0xFF800000> : vector<8xf32>
    %24 = vector.multi_reduction <maximumf>, %23, %cst_14 [1] : vector<8x8xf32> to vector<8xf32>
    %25 = vector.shape_cast %24 : vector<8xf32> to vector<8x1xf32>
    %26 = vector.broadcast %25 : vector<8x1xf32> to vector<8x8xf32>
    %27 = arith.subf %23, %26 : vector<8x8xf32>
    %28 = math.exp %27 : vector<8x8xf32>
    %cst_15 = arith.constant dense<0.000000e+00> : vector<8xf32>
    %29 = vector.multi_reduction <add>, %28, %cst_15 [1] : vector<8x8xf32> to vector<8xf32>
    %30 = vector.shape_cast %29 : vector<8xf32> to vector<8x1xf32>
    %31 = arith.truncf %28 : vector<8x8xf32> to vector<8x8xbf16>
    %cst_16 = arith.constant dense<0.000000e+00> : vector<8x8xf32>
    %32 = tpu.matmul %31, %14, %cst_16 {dimension_numbers = #tpu.dot_dimension_numbers<[1], [0], [0], [1], [0, 0, 1, 1], [], []>} : vector<8x8xbf16>, vector<8x8xbf16>, vector<8x8xf32> -> vector<8x8xf32>
    %33 = tpu.reciprocal %30 {approx = true} : vector<8x1xf32> -> vector<8x1xf32>
    %34 = vector.broadcast %33 : vector<8x1xf32> to vector<8x8xf32>
    %35 = arith.mulf %32, %34 : vector<8x8xf32>
    %c0_17 = arith.constant 0 : index
    %c0_18 = arith.constant 0 : index
    %c0_19 = arith.constant 0 : index
    %36 = vector.load %arg6[%c0_17, %c0_18, %c0_19] : memref<1x8x32xf32, #tpu.memory_space<vmem>>, vector<1x8x32xf32>
    %37 = vector.shape_cast %36 : vector<1x8x32xf32> to vector<8x32xf32>
    %cst_20 = arith.constant dense<0.000000e+00> : vector<8x32xf32>
    %38 = tpu.matmul %35, %37, %cst_20 {dimension_numbers = #tpu.dot_dimension_numbers<[1], [0], [0], [1], [0, 0, 1, 1], [], []>} : vector<8x8xf32>, vector<8x32xf32>, vector<8x32xf32> -> vector<8x32xf32>
    %c0_i32 = arith.constant 0 : i32
    %39 = arith.cmpi eq, %arg1, %c0_i32 : i32
    %40 = arith.extui %39 : i1 to i32
    %c0_i32_21 = arith.constant 0 : i32
    %41 = arith.cmpi ne, %40, %c0_i32_21 : i32
    scf.if %41 {
      %c0_29 = arith.constant 0 : index
      %c0_30 = arith.constant 0 : index
      %51 = vector.load %arg8[%c0_29, %c0_30] : memref<1x32xf32, #tpu.memory_space<vmem>>, vector<1x32xf32>
      %52 = vector.shape_cast %51 : vector<1x32xf32> to vector<1x32xf32>
      %53 = vector.broadcast %52 : vector<1x32xf32> to vector<8x32xf32>
      %c0_31 = arith.constant 0 : index
      %c0_32 = arith.constant 0 : index
      %c0_33 = arith.constant 0 : index
      %54 = vector.load %arg9[%c0_31, %c0_32, %c0_33] : memref<1x8x32xf32, #tpu.memory_space<vmem>>, vector<1x8x32xf32>
      %55 = vector.shape_cast %54 : vector<1x8x32xf32> to vector<8x32xf32>
      %56 = vector.shape_cast %53 : vector<8x32xf32> to vector<1x8x32xf32>
      tpu.vector_store %arg9[%c0_31, %c0_32, %c0_33], %56 {strides = array<i32>} : memref<1x8x32xf32, #tpu.memory_space<vmem>>, vector<1x8x32xf32>,
    } else {
    }
    %c0_22 = arith.constant 0 : index
    %c0_23 = arith.constant 0 : index
    %c0_24 = arith.constant 0 : index
    %42 = vector.load %arg9[%c0_22, %c0_23, %c0_24] : memref<1x8x32xf32, #tpu.memory_space<vmem>>, vector<1x8x32xf32>
    %43 = vector.shape_cast %42 : vector<1x8x32xf32> to vector<8x32xf32>
    %44 = arith.addf %43, %38 : vector<8x32xf32>
    %c0_25 = arith.constant 0 : index
    %c0_26 = arith.constant 0 : index
    %c0_27 = arith.constant 0 : index
    %45 = vector.load %arg9[%c0_25, %c0_26, %c0_27] : memref<1x8x32xf32, #tpu.memory_space<vmem>>, vector<1x8x32xf32>
    %46 = vector.shape_cast %45 : vector<1x8x32xf32> to vector<8x32xf32>
    %47 = vector.shape_cast %44 : vector<8x32xf32> to vector<1x8x32xf32>
    tpu.vector_store %arg9[%c0_25, %c0_26, %c0_27], %47 {strides = array<i32>} : memref<1x8x32xf32, #tpu.memory_space<vmem>>, vector<1x8x32xf32>,
    %c3_i32 = arith.constant 3 : i32
    %48 = arith.cmpi eq, %arg1, %c3_i32 : i32
    %49 = arith.extui %48 : i1 to i32
    %c0_i32_28 = arith.constant 0 : i32
    %50 = arith.cmpi ne, %49, %c0_i32_28 : i32
    scf.if %50 {
      %c0_29 = arith.constant 0 : index
      %c0_30 = arith.constant 0 : index
      %c0_31 = arith.constant 0 : index
      %51 = vector.load %arg9[%c0_29, %c0_30, %c0_31] : memref<1x8x32xf32, #tpu.memory_space<vmem>>, vector<1x8x32xf32>
      %52 = vector.shape_cast %51 : vector<1x8x32xf32> to vector<8x32xf32>
      %c0_32 = arith.constant 0 : index
      %c0_33 = arith.constant 0 : index
      %c0_34 = arith.constant 0 : index
      %53 = vector.load %arg4[%c0_32, %c0_33, %c0_34] : memref<1x8x1xf32, #tpu.memory_space<vmem>>, vector<1x8x1xf32>
      %54 = vector.shape_cast %53 : vector<1x8x1xf32> to vector<8x1xf32>
      %55 = vector.broadcast %54 : vector<8x1xf32> to vector<8x32xf32>
      %56 = arith.mulf %52, %55 : vector<8x32xf32>
      %c0_35 = arith.constant 0 : index
      %c0_36 = arith.constant 0 : index
      %c0_37 = arith.constant 0 : index
      %57 = vector.load %arg9[%c0_35, %c0_36, %c0_37] : memref<1x8x32xf32, #tpu.memory_space<vmem>>, vector<1x8x32xf32>
      %58 = vector.shape_cast %57 : vector<1x8x32xf32> to vector<8x32xf32>
      %59 = vector.shape_cast %56 : vector<8x32xf32> to vector<1x8x32xf32>
      tpu.vector_store %arg9[%c0_35, %c0_36, %c0_37], %59 {strides = array<i32>} : memref<1x8x32xf32, #tpu.memory_space<vmem>>, vector<1x8x32xf32>,
    } else {
    }
    return
  }
  func.func @transform_0(%arg0: i32, %arg1: i32) -> (i32, i32, i32) {
    %c0_i32 = arith.constant 0 : i32
    %c0_i32_0 = arith.constant 0 : i32
    %c0_i32_1 = arith.constant 0 : i32
    return %arg0, %c0_i32, %c0_i32_0 : i32, i32, i32
  }
  func.func @transform_1(%arg0: i32, %arg1: i32) -> (i32, i32, i32) {
    %c0_i32 = arith.constant 0 : i32
    %c0_i32_0 = arith.constant 0 : i32
    %c0_i32_1 = arith.constant 0 : i32
    return %arg0, %c0_i32, %c0_i32_0 : i32, i32, i32
  }
  func.func @transform_2(%arg0: i32, %arg1: i32) -> (i32, i32, i32) {
    %c0_i32 = arith.constant 0 : i32
    %c0_i32_0 = arith.constant 0 : i32
    %c0_i32_1 = arith.constant 0 : i32
    return %arg0, %c0_i32, %c0_i32_0 : i32, i32, i32
  }
  func.func @transform_3(%arg0: i32, %arg1: i32) -> (i32, i32, i32) {
    %c0_i32 = arith.constant 0 : i32
    %c0_i32_0 = arith.constant 0 : i32
    %c0_i32_1 = arith.constant 0 : i32
    return %arg1, %c0_i32, %c0_i32_0 : i32, i32, i32
  }
  func.func @transform_4(%arg0: i32, %arg1: i32) -> (i32, i32, i32) {
    %c0_i32 = arith.constant 0 : i32
    %c0_i32_0 = arith.constant 0 : i32
    %c0_i32_1 = arith.constant 0 : i32
    return %arg1, %c0_i32, %c0_i32_0 : i32, i32, i32
  }
  func.func @transform_5(%arg0: i32, %arg1: i32) -> (i32, i32, i32) {
    %c0_i32 = arith.constant 0 : i32
    %c0_i32_0 = arith.constant 0 : i32
    %c0_i32_1 = arith.constant 0 : i32
    return %arg1, %c0_i32, %c0_i32_0 : i32, i32, i32
  }
  func.func @transform_6(%arg0: i32, %arg1: i32) -> (i32, i32) {
    %c0_i32 = arith.constant 0 : i32
    %c0_i32_0 = arith.constant 0 : i32
    %c0_i32_1 = arith.constant 0 : i32
    return %c0_i32, %c0_i32_0 : i32, i32
  }
  func.func @transform_7(%arg0: i32, %arg1: i32) -> (i32, i32, i32) {
    %c0_i32 = arith.constant 0 : i32
    %c0_i32_0 = arith.constant 0 : i32
    %c0_i32_1 = arith.constant 0 : i32
    return %arg0, %c0_i32, %c0_i32_0 : i32, i32, i32
  }
}

</mosaic_0001>

<llo_original>
// kernel: tpu_custom_call.1
$region0: #{tpu_custom_call.1}
  #allocation0 [shape = 'u32[]', space=smem, size = 0x4, offset = 0x4, fixed_abs, tag = 'smem constant byte address 0x4 - core index']
  #allocation1 [shape = 'u32[144,128]{1,0:T(1,128)}', space=vmem, size = 0x12000, scoped, tag = 'internal scratch']
  %s0 = inlined_call_operand.vmem [shape: f32[2,8,32], index: 0, kind: input, shape index: {}]
  %s1 = inlined_call_operand.vmem [shape: f32[2,1,8], index: 1, kind: input, shape index: {}]
  %s2 = inlined_call_operand.vmem [shape: f32[2,8,1], index: 2, kind: input, shape index: {}]
  %s3 = inlined_call_operand.vmem [shape: f32[4,32,24], index: 3, kind: input, shape index: {}]
  %s4 = inlined_call_operand.vmem [shape: f32[4,8,32], index: 4, kind: input, shape index: {}]
  %s5 = inlined_call_operand.vmem [shape: f32[4,1,24], index: 5, kind: input, shape index: {}]
  %s6 = inlined_call_operand.vmem [shape: f32[1,32], index: 6, kind: input, shape index: {}]
  %s7 = inlined_call_operand.hbm [shape: f32[2,8,32], index: 7, kind: output, shape index: {}]
  %s8 = sld [smem:[#allocation0]]
  $region69: #{tpu_custom_call.1} parent=0
    _
  %s10 = ssub.s32 1, %s8
  %s11 = scalar_select 0, %s10, %s8
  $region1: #{tpu_custom_call.1} parent=0
    #allocation2 [shape = 'u8[8192]{0}', space=vmem, size = 0x2000, scoped, tag = 'output window, operand 0']
    #allocation3 [shape = 's32[2]{0}', space=sflag, size = 0x8, scoped, tag = 'scoped memory for tpu_custom_call.1']
    %12 = vsyncpa [#allocation3], 0
    %s13 = scalar_lea.sflag [#allocation3], 1
    %14 = vsyncpa %s13, 0
    loop: start=0, step=1, limit=10
    $region2: #{tpu_custom_call.1} parent=1 // loop_pre_header
      _
    $region3: #{tpu_custom_call.1} parent=1 // loop_header
      %s16 = sphi 0, %s20
      %p17 = scmp.ge.s32.totalorder %s16, 10
      %s23 = sphi 0, %s35
      %s24 = sphi 0, %s31
      %s25 = sphi 0, %s23
      %s26 = sphi 0, %s24
      %s27 = sphi 0, %s25
      %s28 = sphi 0, %s26
      %s38 = sphi 0, %s40
      %s41 = sphi 0, %s38
      %s42 = sphi 0, %s41
      %s58 = sphi 0, %s42
      %s64 = sphi 0, %s66
      %s67 = sphi 0, %s64
      %s68 = sphi 0, %s67
      %s84 = sphi 0, %s68
      %s90 = sphi 0, %s92
      %s93 = sphi 0, %s90
      %s94 = sphi 0, %s93
      %s110 = sphi 0, %s94
      %s116 = sphi 0, %s118
      %s119 = sphi 0, %s116
      %s120 = sphi 0, %s119
      %s136 = sphi 0, %s120
      %s142 = sphi 0, %s144
      %s145 = sphi 0, %s142
      %s146 = sphi 0, %s145
      %s162 = sphi 0, %s146
      %s168 = sphi 0, %s170
      %s171 = sphi 0, %s168
      %s172 = sphi 0, %s171
      %s188 = sphi 0, %s172
      %s192 = sphi 0, %s192
      %s194 = sphi 0, %s192
      %s195 = sphi 0, %s194
      %s209 = sphi 0, %s195
      %s215 = sphi 0, %s217
      %s218 = sphi 0, %s215
      %s219 = sphi 0, %s218
      %s235 = sphi 0, %s219
    $region4: #{tpu_custom_call.1} parent=1 // loop_header_branch
      %19 = sbr.rel (%p17) target = $region8
    $region5: #{tpu_custom_call.1} parent=1 // loop_body
      %s21 = ssub.s32 %s16, 1
      %s22 = ssub.s32 %s16, 2
      %s29 = sadd.s32 1, %s24
      %p30 = scmp.ge.s32.totalorder %s29, 4
      %s31 = scalar_select %p30, 0, %s29
      %s32 = sadd.s32 1, %s23
      %s33 = scalar_select %p30, %s32, %s23
      %p34 = scmp.ge.s32.totalorder %s33, 2
      %s35 = scalar_select %p34, 0, %s33
      %s36 = ssub.s32 %s23, %s35
      %p37 = scmp.eq.s32.totalorder %s36, 0
      %s39 = sadd.s32 %s38, 1
      %s40 = scalar_select %p37, %s38, %s39
      %p43 = pneg %p37
      %p44 = scmp.eq.s32.totalorder %s16, 7
      %p45 = por %p43, %p44
      %p46 = scmp.ne.s32.totalorder %s38, %s41
      %p47 = scmp.eq.s32.totalorder %s16, 0
      %p48 = por %p46, %p47
      %p49 = scmp.ne.s32.totalorder %s38, %s41
      %p50 = scmp.eq.s32.totalorder %s21, 7
      %p51 = por %p49, %p50
      %p52 = scmp.ne.s32.totalorder %s41, %s42
      %p53 = scmp.eq.s32.totalorder %s21, 0
      %p54 = por %p52, %p53
      %p55 = scmp.ne.s32.totalorder %s41, %s42
      %p56 = scmp.eq.s32.totalorder %s22, 7
      %p57 = por %p55, %p56
      %p59 = scmp.ne.s32.totalorder %s42, %s58
      %p60 = scmp.eq.s32.totalorder %s22, 0
      %p61 = por %p59, %p60
      %s62 = ssub.s32 %s23, %s35
      %p63 = scmp.eq.s32.totalorder %s62, 0
      %s65 = sadd.s32 %s64, 1
      %s66 = scalar_select %p63, %s64, %s65
      %p69 = pneg %p63
      %p70 = scmp.eq.s32.totalorder %s16, 7
      %p71 = por %p69, %p70
      %p72 = scmp.ne.s32.totalorder %s64, %s67
      %p73 = scmp.eq.s32.totalorder %s16, 0
      %p74 = por %p72, %p73
      %p75 = scmp.ne.s32.totalorder %s64, %s67
      %p76 = scmp.eq.s32.totalorder %s21, 7
      %p77 = por %p75, %p76
      %p78 = scmp.ne.s32.totalorder %s67, %s68
      %p79 = scmp.eq.s32.totalorder %s21, 0
      %p80 = por %p78, %p79
      %p81 = scmp.ne.s32.totalorder %s67, %s68
      %p82 = scmp.eq.s32.totalorder %s22, 7
      %p83 = por %p81, %p82
      %p85 = scmp.ne.s32.totalorder %s68, %s84
      %p86 = scmp.eq.s32.totalorder %s22, 0
      %p87 = por %p85, %p86
      %s88 = ssub.s32 %s23, %s35
      %p89 = scmp.eq.s32.totalorder %s88, 0
      %s91 = sadd.s32 %s90, 1
      %s92 = scalar_select %p89, %s90, %s91
      %p95 = pneg %p89
      %p96 = scmp.eq.s32.totalorder %s16, 7
      %p97 = por %p95, %p96
      %p98 = scmp.ne.s32.totalorder %s90, %s93
      %p99 = scmp.eq.s32.totalorder %s16, 0
      %p100 = por %p98, %p99
      %p101 = scmp.ne.s32.totalorder %s90, %s93
      %p102 = scmp.eq.s32.totalorder %s21, 7
      %p103 = por %p101, %p102
      %p104 = scmp.ne.s32.totalorder %s93, %s94
      %p105 = scmp.eq.s32.totalorder %s21, 0
      %p106 = por %p104, %p105
      %p107 = scmp.ne.s32.totalorder %s93, %s94
      %p108 = scmp.eq.s32.totalorder %s22, 7
      %p109 = por %p107, %p108
      %p111 = scmp.ne.s32.totalorder %s94, %s110
      %p112 = scmp.eq.s32.totalorder %s22, 0
      %p113 = por %p111, %p112
      %s114 = ssub.s32 %s24, %s31
      %p115 = scmp.eq.s32.totalorder %s114, 0
      %s117 = sadd.s32 %s116, 1
      %s118 = scalar_select %p115, %s116, %s117
      %p121 = pneg %p115
      %p122 = scmp.eq.s32.totalorder %s16, 7
      %p123 = por %p121, %p122
      %p124 = scmp.ne.s32.totalorder %s116, %s119
      %p125 = scmp.eq.s32.totalorder %s16, 0
      %p126 = por %p124, %p125
      %p127 = scmp.ne.s32.totalorder %s116, %s119
      %p128 = scmp.eq.s32.totalorder %s21, 7
      %p129 = por %p127, %p128
      %p130 = scmp.ne.s32.totalorder %s119, %s120
      %p131 = scmp.eq.s32.totalorder %s21, 0
      %p132 = por %p130, %p131
      %p133 = scmp.ne.s32.totalorder %s119, %s120
      %p134 = scmp.eq.s32.totalorder %s22, 7
      %p135 = por %p133, %p134
      %p137 = scmp.ne.s32.totalorder %s120, %s136
      %p138 = scmp.eq.s32.totalorder %s22, 0
      %p139 = por %p137, %p138
      %s140 = ssub.s32 %s24, %s31
      %p141 = scmp.eq.s32.totalorder %s140, 0
      %s143 = sadd.s32 %s142, 1
      %s144 = scalar_select %p141, %s142, %s143
      %p147 = pneg %p141
      %p148 = scmp.eq.s32.totalorder %s16, 7
      %p149 = por %p147, %p148
      %p150 = scmp.ne.s32.totalorder %s142, %s145
      %p151 = scmp.eq.s32.totalorder %s16, 0
      %p152 = por %p150, %p151
      %p153 = scmp.ne.s32.totalorder %s142, %s145
      %p154 = scmp.eq.s32.totalorder %s21, 7
      %p155 = por %p153, %p154
      %p156 = scmp.ne.s32.totalorder %s145, %s146
      %p157 = scmp.eq.s32.totalorder %s21, 0
      %p158 = por %p156, %p157
      %p159 = scmp.ne.s32.totalorder %s145, %s146
      %p160 = scmp.eq.s32.totalorder %s22, 7
      %p161 = por %p159, %p160
      %p163 = scmp.ne.s32.totalorder %s146, %s162
      %p164 = scmp.eq.s32.totalorder %s22, 0
      %p165 = por %p163, %p164
      %s166 = ssub.s32 %s24, %s31
      %p167 = scmp.eq.s32.totalorder %s166, 0
      %s169 = sadd.s32 %s168, 1
      %s170 = scalar_select %p167, %s168, %s169
      %p173 = pneg %p167
      %p174 = scmp.eq.s32.totalorder %s16, 7
      %p175 = por %p173, %p174
      %p176 = scmp.ne.s32.totalorder %s168, %s171
      %p177 = scmp.eq.s32.totalorder %s16, 0
      %p178 = por %p176, %p177
      %p179 = scmp.ne.s32.totalorder %s168, %s171
      %p180 = scmp.eq.s32.totalorder %s21, 7
      %p181 = por %p179, %p180
      %p182 = scmp.ne.s32.totalorder %s171, %s172
      %p183 = scmp.eq.s32.totalorder %s21, 0
      %p184 = por %p182, %p183
      %p185 = scmp.ne.s32.totalorder %s171, %s172
      %p186 = scmp.eq.s32.totalorder %s22, 7
      %p187 = por %p185, %p186
      %p189 = scmp.ne.s32.totalorder %s172, %s188
      %p190 = scmp.eq.s32.totalorder %s22, 0
      %p191 = por %p189, %p190
      %s193 = sadd.s32 %s192, 1
      %p196 = scmp.eq.s32.totalorder %s16, 7
      %p197 = scmp.ne.s32.totalorder %s192, %s194
      %p198 = scmp.eq.s32.totalorder %s16, 0
      %p199 = por %p197, %p198
      %p200 = scmp.ne.s32.totalorder %s192, %s194
      %p201 = scmp.eq.s32.totalorder %s21, 7
      %p202 = por %p200, %p201
      %p203 = scmp.ne.s32.totalorder %s194, %s195
      %p204 = scmp.eq.s32.totalorder %s21, 0
      %p205 = por %p203, %p204
      %p206 = scmp.ne.s32.totalorder %s194, %s195
      %p207 = scmp.eq.s32.totalorder %s22, 7
      %p208 = por %p206, %p207
      %p210 = scmp.ne.s32.totalorder %s195, %s209
      %p211 = scmp.eq.s32.totalorder %s22, 0
      %p212 = por %p210, %p211
      %s213 = ssub.s32 %s23, %s35
      %p214 = scmp.eq.s32.totalorder %s213, 0
      %s216 = sadd.s32 %s215, 1
      %s217 = scalar_select %p214, %s215, %s216
      %p220 = pneg %p214
      %p221 = scmp.eq.s32.totalorder %s16, 7
      %p222 = por %p220, %p221
      %p223 = scmp.ne.s32.totalorder %s215, %s218
      %p224 = scmp.eq.s32.totalorder %s16, 0
      %p225 = por %p223, %p224
      %p226 = scmp.ne.s32.totalorder %s215, %s218
      %p227 = scmp.eq.s32.totalorder %s21, 7
      %p228 = por %p226, %p227
      %p229 = scmp.ne.s32.totalorder %s218, %s219
      %p230 = scmp.eq.s32.totalorder %s21, 0
      %p231 = por %p229, %p230
      %p232 = scmp.ne.s32.totalorder %s218, %s219
      %p233 = scmp.eq.s32.totalorder %s22, 7
      %p234 = por %p232, %p233
      %p236 = scmp.ne.s32.totalorder %s219, %s235
      %p237 = scmp.eq.s32.totalorder %s22, 0
      %p238 = por %p236, %p237
      %p239 = scmp.le.s32.totalorder 1, %s16
      %p240 = scmp.lt.s32.totalorder %s16, 9
      %p241 = pnand %p239, %p240
      %p242 = pneg %p241
      // Predicated region
      $region9: #{tpu_custom_call.1} parent=5 // pred_check
        _
      $region10: #{tpu_custom_call.1} parent=5 // pred_check_branch
        %244 = sbr.rel (%p241) target = $region12
      $region11: #{tpu_custom_call.1} parent=5 // pred_region
        %s245 = ssub.s32 %s16, 1
        // Predicated region
        $region13: #{tpu_custom_call.1} parent=11 // pred_check
          %p246 = pneg %p205
        $region14: #{tpu_custom_call.1} parent=11 // pred_check_branch
          %248 = sbr.rel (%p246) target = $region16
        $region15: #{tpu_custom_call.1} parent=11 // pred_region
          _
        $region16: #{tpu_custom_call.1} parent=11 // pred_fallthru
          _
      $region12: #{tpu_custom_call.1} parent=5 // pred_fallthru
        _
      %p249 = scmp.lt.s32.totalorder %s16, 8
      // Predicated region
      $region17: #{tpu_custom_call.1} parent=5 // pred_check
        %p250 = pneg %p249
      $region18: #{tpu_custom_call.1} parent=5 // pred_check_branch
        %252 = sbr.rel (%p250) target = $region20
      $region19: #{tpu_custom_call.1} parent=5 // pred_region
        // Predicated region
        $region21: #{tpu_custom_call.1} parent=19 // pred_check
          %p253 = pneg %p48
        $region22: #{tpu_custom_call.1} parent=19 // pred_check_branch
          %255 = sbr.rel (%p253) target = $region24
        $region23: #{tpu_custom_call.1} parent=19 // pred_region
          %p256 = scmp.lt.s32.totalorder %s23, 1
          %s257 = scalar_select %p256, %s23, 1
          %s258 = smul.addr %s257, 8
          %s259 = scalar_lea.vmem %s0, %s258
        $region24: #{tpu_custom_call.1} parent=19 // pred_fallthru
          _
        // Predicated region
        $region25: #{tpu_custom_call.1} parent=19 // pred_check
          %p260 = pneg %p74
        $region26: #{tpu_custom_call.1} parent=19 // pred_check_branch
          %262 = sbr.rel (%p260) target = $region28
        $region27: #{tpu_custom_call.1} parent=19 // pred_region
          %p263 = scmp.lt.s32.totalorder %s23, 1
          %s264 = scalar_select %p263, %s23, 1
          %s265 = scalar_lea.vmem %s1, %s264
        $region28: #{tpu_custom_call.1} parent=19 // pred_fallthru
          _
        // Predicated region
        $region29: #{tpu_custom_call.1} parent=19 // pred_check
          %p266 = pneg %p100
        $region30: #{tpu_custom_call.1} parent=19 // pred_check_branch
          %268 = sbr.rel (%p266) target = $region32
        $region31: #{tpu_custom_call.1} parent=19 // pred_region
          %p269 = scmp.lt.s32.totalorder %s23, 1
          %s270 = scalar_select %p269, %s23, 1
          %s271 = smul.addr %s270, 8
          %s272 = scalar_lea.vmem %s2, %s271
        $region32: #{tpu_custom_call.1} parent=19 // pred_fallthru
          _
        // Predicated region
        $region33: #{tpu_custom_call.1} parent=19 // pred_check
          %p273 = pneg %p126
        $region34: #{tpu_custom_call.1} parent=19 // pred_check_branch
          %275 = sbr.rel (%p273) target = $region36
        $region35: #{tpu_custom_call.1} parent=19 // pred_region
          %p276 = scmp.lt.s32.totalorder %s24, 3
          %s277 = scalar_select %p276, %s24, 3
          %s278 = smul.addr %s277, 4
          %s279 = smul.addr %s278, 8
          %s280 = scalar_lea.vmem %s3, %s279
        $region36: #{tpu_custom_call.1} parent=19 // pred_fallthru
          _
        // Predicated region
        $region37: #{tpu_custom_call.1} parent=19 // pred_check
          %p281 = pneg %p152
        $region38: #{tpu_custom_call.1} parent=19 // pred_check_branch
          %283 = sbr.rel (%p281) target = $region40
        $region39: #{tpu_custom_call.1} parent=19 // pred_region
          %p284 = scmp.lt.s32.totalorder %s24, 3
          %s285 = scalar_select %p284, %s24, 3
          %s286 = smul.addr %s285, 8
          %s287 = scalar_lea.vmem %s4, %s286
        $region40: #{tpu_custom_call.1} parent=19 // pred_fallthru
          _
        // Predicated region
        $region41: #{tpu_custom_call.1} parent=19 // pred_check
          %p288 = pneg %p178
        $region42: #{tpu_custom_call.1} parent=19 // pred_check_branch
          %290 = sbr.rel (%p288) target = $region44
        $region43: #{tpu_custom_call.1} parent=19 // pred_region
          %p291 = scmp.lt.s32.totalorder %s24, 3
          %s292 = scalar_select %p291, %s24, 3
          %s293 = scalar_lea.vmem %s5, %s292
        $region44: #{tpu_custom_call.1} parent=19 // pred_fallthru
          _
      $region20: #{tpu_custom_call.1} parent=5 // pred_fallthru
        _
      %p294 = scmp.le.s32.totalorder 1, %s16
      %p295 = scmp.lt.s32.totalorder %s16, 9
      %p296 = pnand %p294, %p295
      %p297 = pneg %p296
      // Predicated region
      $region45: #{tpu_custom_call.1} parent=5 // pred_check
        _
      $region46: #{tpu_custom_call.1} parent=5 // pred_check_branch
        %299 = sbr.rel (%p296) target = $region48
      $region47: #{tpu_custom_call.1} parent=5 // pred_region
        %s300 = ssub.s32 %s16, 1
        %p301 = scmp.lt.s32.totalorder %s25, 1
        %s302 = scalar_select %p301, %s25, 1
        %s303 = smul.addr %s302, 8
        %s304 = scalar_lea.vmem %s0, %s303
        %p305 = pneg %p54
        %p306 = pneg %p51
        %p307 = scmp.lt.s32.totalorder %s25, 1
        %s308 = scalar_select %p307, %s25, 1
        %s309 = scalar_lea.vmem %s1, %s308
        %p310 = pneg %p80
        %p311 = pneg %p77
        %p312 = scmp.lt.s32.totalorder %s25, 1
        %s313 = scalar_select %p312, %s25, 1
        %s314 = smul.addr %s313, 8
        %s315 = scalar_lea.vmem %s2, %s314
        %p316 = pneg %p106
        %p317 = pneg %p103
        %p318 = scmp.lt.s32.totalorder %s26, 3
        %s319 = scalar_select %p318, %s26, 3
        %s320 = smul.addr %s319, 4
        %s321 = smul.addr %s320, 8
        %s322 = scalar_lea.vmem %s3, %s321
        %p323 = pneg %p132
        %p324 = pneg %p129
        %p325 = scmp.lt.s32.totalorder %s26, 3
        %s326 = scalar_select %p325, %s26, 3
        %s327 = smul.addr %s326, 8
        %s328 = scalar_lea.vmem %s4, %s327
        %p329 = pneg %p158
        %p330 = pneg %p155
        %p331 = scmp.lt.s32.totalorder %s26, 3
        %s332 = scalar_select %p331, %s26, 3
        %s333 = scalar_lea.vmem %s5, %s332
        %p334 = pneg %p184
        %p335 = pneg %p181
        %p336 = pneg %p205
        %p337 = pneg %p202
        %p338 = pneg %p231
        %p339 = pneg %p228
        %s340 = sand.u32 %s218, 1
        %s341 = scalar_lea.sflag [#allocation3], %s340
        %s342 = sand.u32 %s218, 1
        %s343 = smul.addr %s342, 8
        %s344 = scalar_lea.vmem [#allocation2], %s343
        %p345 = scmp.lt.s32.totalorder %s25, 1
        %s346 = scalar_select %p345, %s25, 1
        %s347 = smul.addr %s346, 8
        %s348 = scalar_lea.vmem %s0, %s347
        %p349 = scmp.lt.s32.totalorder %s25, 1
        %s350 = scalar_select %p349, %s25, 1
        %s351 = scalar_lea.vmem %s1, %s350
        %p352 = scmp.lt.s32.totalorder %s25, 1
        %s353 = scalar_select %p352, %s25, 1
        %s354 = smul.addr %s353, 8
        %s355 = scalar_lea.vmem %s2, %s354
        %p356 = scmp.lt.s32.totalorder %s26, 3
        %s357 = scalar_select %p356, %s26, 3
        %s358 = smul.addr %s357, 4
        %s359 = smul.addr %s358, 8
        %s360 = scalar_lea.vmem %s3, %s359
        %p361 = scmp.lt.s32.totalorder %s26, 3
        %s362 = scalar_select %p361, %s26, 3
        %s363 = smul.addr %s362, 8
        %s364 = scalar_lea.vmem %s4, %s363
        %p365 = scmp.lt.s32.totalorder %s26, 3
        %s366 = scalar_select %p365, %s26, 3
        %s367 = scalar_lea.vmem %s5, %s366
        %v369 = vld [vmem:[%s348] sm:$0xff]
        %v370 = vld [vmem:[%s360] sm:$0xff]
        %v371 = vld [vmem:[%s360 + $0x8] sm:$0xff]
        %v372 = vld [vmem:[%s360 + $0x10] sm:$0xff]
        %v373 = vld [vmem:[%s360 + $0x18] sm:$0xff]
        %v374 = vld [vmem:[%s367] sm:$0x1]
        %v376 = vlaneseq
        %v377 = vshrl.u32 %v376, 7
        %v378 = vsub.s32 0, %v377
        %v379 = vrot.slane %v374, %v378
        %vm381 = vcmask 261120
        %v383 = vsel %vm381, %v369, 0
        %385 = vmatprep.subr.mxu0 0.0
        %386 = vmatpush1.msra.mxu0 0.0
        %387 = vmatprep.subr.mxu0 0.0
        %388 = vmatpush1.msra.mxu0 0.0
        %389 = vmatprep.subr.mxu0 0.0
        %390 = vmatpush1.msra.mxu0 0.0
        %391 = vmatprep.subr.mxu0 0.0
        %392 = vmatpush1.msra.mxu0 0.0
        %393 = vmatprep.subr.mxu0 0.0
        %394 = vmatpush1.msra.mxu0 0.0
        %395 = vmatprep.subr.mxu0 0.0
        %396 = vmatpush1.msra.mxu0 0.0
        %397 = vmatprep.subr.mxu0 0.0
        %398 = vmatpush1.msra.mxu0 0.0
        %399 = vmatprep.subr.mxu0 0.0
        %400 = vmatpush1.msra.mxu0 0.0
        %401 = vmatprep.subr.mxu0 0.0
        %402 = vmatpush1.msra.mxu0 0.0
        %403 = vmatprep.subr.mxu0 0.0
        %404 = vmatpush1.msra.mxu0 0.0
        %405 = vmatprep.subr.mxu0 0.0
        %406 = vmatpush1.msra.mxu0 0.0
        %407 = vmatprep.subr.mxu0 0.0
        %408 = vmatpush1.msra.mxu0 0.0
        %409 = vmatprep.subr.mxu0 0.0
        %410 = vmatpush1.msra.mxu0 %v373
        %411 = vmatprep.subr.mxu0 0.0
        %412 = vmatpush1.msra.mxu0 %v372
        %413 = vmatprep.subr.mxu0 0.0
        %414 = vmatpush1.msra.mxu0 %v371
        %415 = vmatprep.subr.mxu0 0.0
        %416 = vmatpush1.msra.mxu0 %v370
        %417 = vmatprep.subr.mxu0 0.0
        %418 = vmatpush2.msra.mxu0 0.0
        %419 = vmatprep.subr.mxu0 0.0
        %420 = vmatpush2.msra.mxu0 0.0
        %421 = vmatprep.subr.mxu0 0.0
        %422 = vmatpush2.msra.mxu0 0.0
        %423 = vmatprep.subr.mxu0 0.0
        %424 = vmatpush2.msra.mxu0 0.0
        %425 = vmatprep.subr.mxu0 0.0
        %426 = vmatpush2.msra.mxu0 0.0
        %427 = vmatprep.subr.mxu0 0.0
        %428 = vmatpush2.msra.mxu0 0.0
        %429 = vmatprep.subr.mxu0 0.0
        %430 = vmatpush2.msra.mxu0 0.0
        %431 = vmatprep.subr.mxu0 0.0
        %432 = vmatpush2.msra.mxu0 0.0
        %433 = vmatprep.subr.mxu0 0.0
        %434 = vmatpush2.msra.mxu0 0.0
        %435 = vmatprep.subr.mxu0 0.0
        %436 = vmatpush2.msra.mxu0 0.0
        %437 = vmatprep.subr.mxu0 0.0
        %438 = vmatpush2.msra.mxu0 0.0
        %439 = vmatprep.subr.mxu0 0.0
        %440 = vmatpush2.msra.mxu0 0.0
        %441 = vmatprep.subr.mxu0 0.0
        %442 = vmatpush2.msra.mxu0 0.0
        %443 = vmatprep.subr.mxu0 0.0
        %444 = vmatpush2.msra.mxu0 0.0
        %445 = vmatprep.subr.mxu0 0.0
        %446 = vmatpush2.msra.mxu0 0.0
        %447 = vmatprep.subr.mxu0 0.0
        %448 = vmatpush2.msra.mxu0 0.0
        %449 = vmatprep.mubr.f32.mxu0 0.0
        %450 = vmatmul.mubr.f32.gmra.mxu0 %v383
        %v451 = vpop.f32.mrf.mxu0
        %v452 = vadd.f32 %v379, %v451
        %v453 = vpop.f32.mrf.mxu0
        %454 = vdwg.mxu0
        %v455 = vpack.c.bf16 %v452, %v452
        %457 = vrot.lane.b32.xlu0 %v455, 120
        %v458 = vpop.permute.xlu0 %457
        %vm459 = vcmask 64512
        %v461 = vsel %vm459, %v455, 0
        %v464 = vsel %vm459, %v458, 0
        %466 = vmatprep.subr.bf16.mxu0 0
        %467 = vmatpush1.bf16.xpose.msra.mxu0 0
        %468 = vmatprep.subr.bf16.mxu0 0
        %469 = vmatpush1.bf16.xpose.msra.mxu0 0
        %470 = vmatprep.subr.bf16.mxu0 0
        %471 = vmatpush1.bf16.xpose.msra.mxu0 0
        %472 = vmatprep.subr.bf16.mxu0 0
        %473 = vmatpush1.bf16.xpose.msra.mxu0 0
        %474 = vmatprep.subr.bf16.mxu0 0
        %475 = vmatpush1.bf16.xpose.msra.mxu0 0
        %476 = vmatprep.subr.bf16.mxu0 0
        %477 = vmatpush1.bf16.xpose.msra.mxu0 0
        %478 = vmatprep.subr.bf16.mxu0 0
        %479 = vmatpush1.bf16.xpose.msra.mxu0 0
        %480 = vmatprep.subr.bf16.mxu0 0
        %481 = vmatpush1.bf16.xpose.msra.mxu0 %v464
        %482 = vmatprep.subr.bf16.mxu0 0
        %483 = vmatpush2.bf16.xpose.msra.mxu0 0
        %484 = vmatprep.subr.bf16.mxu0 0
        %485 = vmatpush2.bf16.xpose.msra.mxu0 0
        %486 = vmatprep.subr.bf16.mxu0 0
        %487 = vmatpush2.bf16.xpose.msra.mxu0 0
        %488 = vmatprep.subr.bf16.mxu0 0
        %489 = vmatpush2.bf16.xpose.msra.mxu0 0
        %490 = vmatprep.subr.bf16.mxu0 0
        %491 = vmatpush2.bf16.xpose.msra.mxu0 0
        %492 = vmatprep.subr.bf16.mxu0 0
        %493 = vmatpush2.bf16.xpose.msra.mxu0 0
        %494 = vmatprep.subr.bf16.mxu0 0
        %495 = vmatpush2.bf16.xpose.msra.mxu0 0
        %496 = vmatprep.subr.bf16.mxu0 0
        %497 = vmatpush2.bf16.xpose.msra.mxu0 0
        %498 = vmatprep.mubr.bf16.mxu0 0
        %499 = vmatmul.mubr.bf16.gmra.mxu0 %v461
        %v500 = vpop.f32.mrf.mxu0
        %v501 = vadd.f32 0.0, %v500
        %v502 = vpop.f32.mrf.mxu0
        %v503 = vpop.f32.mrf.mxu0
        %v504 = vpop.f32.mrf.mxu0
        %505 = vdwg.mxu0
        %v506 = vld [vmem:[%s351] sm:$0x1]
        %vm507 = vcmp.gt.f32.partialorder %v506, 0.0
        %v508 = vsel %vm507, 1, 0
        %v509 = vlaneseq
        %v510 = vshrl.u32 %v509, 7
        %v511 = vsub.s32 0, %v510
        %v512 = vrot.slane %v508, %v511
        %vm513 = vcmp.eq.s32.totalorder %v512, 1
        %v514 = vsel %vm513, %v501, -1e+30
        %v515 = vsel %vm459, %v514, -inf
        %516 = vmax.xlane.f32.xlu0 %v515
        %v517 = vpop.xlane.xlu0 %516
        %v518 = vsub.f32 %v514, %v517
        %v519 = vmul.f32 %v518, 1.442695
        %v520 = vpow.pop %v519
        %v521 = vsel %vm459, %v520, 0.0
        %522 = vadd.xlane.f32.xlu0 %v521
        %v523 = vpop.xlane.xlu0 %522
        %v524 = vpack.c.bf16 %v520, %v520
        %525 = vrot.lane.b32.xlu0 %v455, 112
        %v526 = vpop.permute.xlu0 %525
        %v528 = vsel %vm459, %v524, 0
        %vm530 = vcmask 1043456
        %v532 = vsel %vm530, %v526, 0
        %534 = vmatprep.subr.bf16.mxu0 0
        %535 = vmatpush1.bf16.msra.mxu0 0
        %536 = vmatprep.subr.bf16.mxu0 0
        %537 = vmatpush1.bf16.msra.mxu0 0
        %538 = vmatprep.subr.bf16.mxu0 0
        %539 = vmatpush1.bf16.msra.mxu0 0
        %540 = vmatprep.subr.bf16.mxu0 0
        %541 = vmatpush1.bf16.msra.mxu0 0
        %542 = vmatprep.subr.bf16.mxu0 0
        %543 = vmatpush1.bf16.msra.mxu0 0
        %544 = vmatprep.subr.bf16.mxu0 0
        %545 = vmatpush1.bf16.msra.mxu0 0
        %546 = vmatprep.subr.bf16.mxu0 0
        %547 = vmatpush1.bf16.msra.mxu0 0
        %548 = vmatprep.subr.bf16.mxu0 0
        %549 = vmatpush1.bf16.msra.mxu0 %v532
        %550 = vmatprep.subr.bf16.mxu0 0
        %551 = vmatpush2.bf16.msra.mxu0 0
        %552 = vmatprep.subr.bf16.mxu0 0
        %553 = vmatpush2.bf16.msra.mxu0 0
        %554 = vmatprep.subr.bf16.mxu0 0
        %555 = vmatpush2.bf16.msra.mxu0 0
        %556 = vmatprep.subr.bf16.mxu0 0
        %557 = vmatpush2.bf16.msra.mxu0 0
        %558 = vmatprep.subr.bf16.mxu0 0
        %559 = vmatpush2.bf16.msra.mxu0 0
        %560 = vmatprep.subr.bf16.mxu0 0
        %561 = vmatpush2.bf16.msra.mxu0 0
        %562 = vmatprep.subr.bf16.mxu0 0
        %563 = vmatpush2.bf16.msra.mxu0 0
        %564 = vmatprep.subr.bf16.mxu0 0
        %565 = vmatpush2.bf16.msra.mxu0 0
        %566 = vmatprep.mubr.bf16.mxu0 0
        %567 = vmatmul.mubr.bf16.gmra.mxu0 %v528
        %v568 = vpop.f32.mrf.mxu0
        %v569 = vadd.f32 0.0, %v568
        %v570 = vpop.f32.mrf.mxu0
        %v571 = vpop.f32.mrf.mxu0
        %v572 = vpop.f32.mrf.mxu0
        %573 = vdwg.mxu0
        %v574 = vrcp.pop %v523
        %v575 = vmul.f32 %v569, %v574
        %v576 = vld [vmem:[%s364] sm:$0xff]
        %v578 = vsel %vm459, %v575, 0
        %580 = vmatprep.subr.mxu0 0.0
        %581 = vmatpush1.msra.mxu0 0.0
        %582 = vmatprep.subr.mxu0 0.0
        %583 = vmatpush1.msra.mxu0 0.0
        %584 = vmatprep.subr.mxu0 0.0
        %585 = vmatpush1.msra.mxu0 0.0
        %586 = vmatprep.subr.mxu0 0.0
        %587 = vmatpush1.msra.mxu0 0.0
        %588 = vmatprep.subr.mxu0 0.0
        %589 = vmatpush1.msra.mxu0 0.0
        %590 = vmatprep.subr.mxu0 0.0
        %591 = vmatpush1.msra.mxu0 0.0
        %592 = vmatprep.subr.mxu0 0.0
        %593 = vmatpush1.msra.mxu0 0.0
        %594 = vmatprep.subr.mxu0 0.0
        %595 = vmatpush1.msra.mxu0 0.0
        %596 = vmatprep.subr.mxu0 0.0
        %597 = vmatpush1.msra.mxu0 0.0
        %598 = vmatprep.subr.mxu0 0.0
        %599 = vmatpush1.msra.mxu0 0.0
        %600 = vmatprep.subr.mxu0 0.0
        %601 = vmatpush1.msra.mxu0 0.0
        %602 = vmatprep.subr.mxu0 0.0
        %603 = vmatpush1.msra.mxu0 0.0
        %604 = vmatprep.subr.mxu0 0.0
        %605 = vmatpush1.msra.mxu0 0.0
        %606 = vmatprep.subr.mxu0 0.0
        %607 = vmatpush1.msra.mxu0 0.0
        %608 = vmatprep.subr.mxu0 0.0
        %609 = vmatpush1.msra.mxu0 0.0
        %610 = vmatprep.subr.mxu0 0.0
        %611 = vmatpush1.msra.mxu0 %v576
        %612 = vmatprep.subr.mxu0 0.0
        %613 = vmatpush2.msra.mxu0 0.0
        %614 = vmatprep.subr.mxu0 0.0
        %615 = vmatpush2.msra.mxu0 0.0
        %616 = vmatprep.subr.mxu0 0.0
        %617 = vmatpush2.msra.mxu0 0.0
        %618 = vmatprep.subr.mxu0 0.0
        %619 = vmatpush2.msra.mxu0 0.0
        %620 = vmatprep.subr.mxu0 0.0
        %621 = vmatpush2.msra.mxu0 0.0
        %622 = vmatprep.subr.mxu0 0.0
        %623 = vmatpush2.msra.mxu0 0.0
        %624 = vmatprep.subr.mxu0 0.0
        %625 = vmatpush2.msra.mxu0 0.0
        %626 = vmatprep.subr.mxu0 0.0
        %627 = vmatpush2.msra.mxu0 0.0
        %628 = vmatprep.subr.mxu0 0.0
        %629 = vmatpush2.msra.mxu0 0.0
        %630 = vmatprep.subr.mxu0 0.0
        %631 = vmatpush2.msra.mxu0 0.0
        %632 = vmatprep.subr.mxu0 0.0
        %633 = vmatpush2.msra.mxu0 0.0
        %634 = vmatprep.subr.mxu0 0.0
        %635 = vmatpush2.msra.mxu0 0.0
        %636 = vmatprep.subr.mxu0 0.0
        %637 = vmatpush2.msra.mxu0 0.0
        %638 = vmatprep.subr.mxu0 0.0
        %639 = vmatpush2.msra.mxu0 0.0
        %640 = vmatprep.subr.mxu0 0.0
        %641 = vmatpush2.msra.mxu0 0.0
        %642 = vmatprep.subr.mxu0 0.0
        %643 = vmatpush2.msra.mxu0 0.0
        %644 = vmatprep.mubr.f32.mxu0 0.0
        %645 = vmatmul.mubr.f32.gmra.mxu0 %v578
        %v646 = vpop.f32.mrf.mxu0
        %v647 = vadd.f32 0.0, %v646
        %v648 = vpop.f32.mrf.mxu0
        %649 = vdwg.mxu0
        %p650 = scmp.eq.s32.totalorder %s26, 0
        // Predicated region
        $region49: #{tpu_custom_call.1} parent=47 // pred_check
          %p651 = pneg %p650
        $region50: #{tpu_custom_call.1} parent=47 // pred_check_branch
          %653 = sbr.rel (%p651) target = $region52
        $region51: #{tpu_custom_call.1} parent=47 // pred_region
          %v654 = vld [vmem:[%s6] sm:$0x1]
          %v656 = vlaneseq
          %v657 = vshrl.u32 %v656, 7
          %v658 = vsub.s32 0, %v657
          %v659 = vrot.slane %v654, %v658
          %661 = vst.msk [vmem:[%s344] sm:$0xff] %vm381, %v659
        $region52: #{tpu_custom_call.1} parent=47 // pred_fallthru
          _
        %v662 = vld [vmem:[%s344] sm:$0xff]
        %v663 = vadd.f32 %v662, %v647
        %664 = vst.msk [vmem:[%s344] sm:$0xff] %vm381, %v663
        %p665 = scmp.eq.s32.totalorder %s26, 3
        // Predicated region
        $region53: #{tpu_custom_call.1} parent=47 // pred_check
          %p666 = pneg %p665
        $region54: #{tpu_custom_call.1} parent=47 // pred_check_branch
          %668 = sbr.rel (%p666) target = $region56
        $region55: #{tpu_custom_call.1} parent=47 // pred_region
          %v669 = vld [vmem:[%s344] sm:$0xff]
          %v670 = vld [vmem:[%s355] sm:$0xff]
          %672 = vset.pattern.permute.xlu0 0
          %673 = vperm.xlu0 %672, %v670
          %v674 = vpop.permute.xlu0 %673
          %v676 = vmul.f32 %v669, %v674
          %677 = vst.msk [vmem:[%s344] sm:$0xff] %vm381, %v676
        $region56: #{tpu_custom_call.1} parent=47 // pred_fallthru
          _
        %s678 = sand.u32 %s218, 1
        %s679 = scalar_lea.sflag [#allocation3], %s678
        %s680 = sand.u32 %s218, 1
        %s681 = smul.addr %s680, 8
        %s682 = scalar_lea.vmem [#allocation2], %s681
        // Predicated region
        $region57: #{tpu_custom_call.1} parent=47 // pred_check
          %p683 = pneg %p228
        $region58: #{tpu_custom_call.1} parent=47 // pred_check_branch
          %685 = sbr.rel (%p683) target = $region60
        $region59: #{tpu_custom_call.1} parent=47 // pred_region
          %s687 = ssub.s32 128, 128
          %688 = vsyncadd %s679, %s687
          %s689 = smul.addr %s25, 128
          %s690 = scalar_lea.hbm %s7, %s689
          %s692 = sshll.u32 %s682, 4
          %s693 = int_to_ptr.vmem [resolvable:$true] %s692
          %695 = dma.vmem_to_hbm [thread:$0]  %s693, 128, %s690, %s679
        $region60: #{tpu_custom_call.1} parent=47 // pred_fallthru
          _
      $region48: #{tpu_custom_call.1} parent=5 // pred_fallthru
        _
      %p696 = scmp.le.s32.totalorder 2, %s16
      // Predicated region
      $region61: #{tpu_custom_call.1} parent=5 // pred_check
        %p697 = pneg %p696
      $region62: #{tpu_custom_call.1} parent=5 // pred_check_branch
        %699 = sbr.rel (%p697) target = $region64
      $region63: #{tpu_custom_call.1} parent=5 // pred_region
        %s700 = ssub.s32 %s16, 2
        // Predicated region
        $region65: #{tpu_custom_call.1} parent=63 // pred_check
          %p701 = pneg %p234
        $region66: #{tpu_custom_call.1} parent=63 // pred_check_branch
          %703 = sbr.rel (%p701) target = $region68
        $region67: #{tpu_custom_call.1} parent=63 // pred_region
          %s704 = sand.u32 %s219, 1
          %s705 = scalar_lea.sflag [#allocation3], %s704
          %s706 = sand.u32 %s219, 1
          %s707 = smul.addr %s706, 8
          %s708 = scalar_lea.vmem [#allocation2], %s707
          %709 = dma.done %s705, 128
        $region68: #{tpu_custom_call.1} parent=63 // pred_fallthru
          _
      $region64: #{tpu_custom_call.1} parent=5 // pred_fallthru
        _
    $region6: #{tpu_custom_call.1} parent=1 // loop_footer
      %s20 = sadd.s32 1, %s16
    $region7: #{tpu_custom_call.1} parent=1 // loop_footer_branch
      %15 = sbr.rel target = $region3
    $region8: #{tpu_custom_call.1} parent=1 // loop_exit
      _
    %710 = vsyncpa [#allocation3], 1
    %s711 = scalar_lea.sflag [#allocation3], 1
    %712 = vsyncpa %s711, 1

</llo_original>
